<compile_context>
chip_gen: v7x
topology: tpu7x:2x2x1
jax: 0.10.0
libtpu: 0.0.40
codegen_flags: <defaults>
</compile_context>

<pallas_src>
import jax
import jax.numpy as jnp
from jax.experimental import pallas as pl
from jax.experimental.pallas import tpu as pltpu


def _add_kernel(net_ref, pos_ref, out_ref):
    # net_ref/out_ref: (tB, tC) tiles; pos_ref: (1, tC), broadcast over batch tile.
    out_ref[...] = net_ref[...] + pos_ref[...]


def _choose_tiles(B: int, T: int, itemsize: int) -> tuple[int, int]:
    """Pick (batch_tile, lane_tile) for the flattened (B, T=S*D) problem."""
    # Batch tile: full extent when small (legal: equals full dim), else a
    # sublane-aligned 8. Partial trailing blocks are handled by Pallas masking.
    tB = B if B <= 8 else 8

    # Lane tile: multiple of 128, sized so one net/out block is ~2 MiB.
    # With double buffering of net + pos + out this stays well under the scoped
    # VMEM default on every generation (incl. v7x's 64 MiB total / 32 MiB scoped).
    target_block_bytes = 2 * 1024 * 1024
    max_tc = max(128, ((target_block_bytes // (itemsize * tB)) // 128) * 128)

    if T % 128 == 0:
        tC = min(T, max_tc)
    elif T > 128:
        # Lane-dense blocks everywhere except a masked partial trailing block.
        tC = min((T // 128) * 128, max_tc)
    else:
        # Tiny flattened dim: single full-extent block (always a legal BlockSpec).
        tC = T
    return tB, tC


def positional_encoding_forward(
    net: jax.Array,
    pos_encoding,
    *,
    num_head_tokens: int,
    is_vision: bool,
    enable: bool = True,
) -> jax.Array:
    """JAX/Pallas equivalent of PositionalEncoding.forward (hwp=None, eval mode)."""
    if not enable or pos_encoding is None:
        return net

    B, S, D = net.shape

    if is_vision:
        # hwp=None and matching token counts -> interpolate_pos_encoding returns
        # pos_encoding unchanged; it is added to every token.
        # TODO(synk): bicubic interpolation of the grid pos_encoding when the
        # current token count / aspect ratio differs (torch F.interpolate bicubic).
        if pos_encoding.shape[1] != S:
            raise ValueError(
                "vision path without interpolation requires matching token counts"
            )
        feature_span = S
    else:
        feature_span = S - num_head_tokens if num_head_tokens > 0 else S
        feature_span = max(feature_span, 0)
        if pos_encoding.shape[1] < feature_span:
            # Mirror PyTorch: the broadcast / in-place add would raise there too.
            raise ValueError(
                f"pos_encoding has {pos_encoding.shape[1]} tokens but "
                f"{feature_span} are required"
            )

    # Pre-mask pos in the wrapper: slice the tokens that get an encoding and
    # zero-pad the rest (head tokens / tail) so the kernel is a pure add.
    pos = pos_encoding[:, :feature_span].astype(net.dtype)
    if feature_span < S:
        pos = jnp.pad(pos, ((0, 0), (0, S - feature_span), (0, 0)))

    # Lane-dense layout: flatten token*feature into one wide last dim.
    T = S * D
    net2 = net.reshape(B, T)
    pos2 = pos.reshape(1, T)

    tB, tC = _choose_tiles(B, T, jnp.dtype(net.dtype).itemsize)
    grid = (pl.cdiv(B, tB), pl.cdiv(T, tC))

    out2 = pl.pallas_call(
        _add_kernel,
        out_shape=jax.ShapeDtypeStruct((B, T), net.dtype),
        grid=grid,
        in_specs=[
            pl.BlockSpec((tB, tC), lambda i, j: (i, j)),   # net tile
            pl.BlockSpec((1, tC), lambda i, j: (0, j)),    # shared, pre-masked pos
        ],
        out_specs=pl.BlockSpec((tB, tC), lambda i, j: (i, j)),
        compiler_params=pltpu.CompilerParams(
            dimension_semantics=("parallel", "parallel"),
        ),
    )(net2, pos2)

    return out2.reshape(B, S, D)


def _reference(net, pos_encoding, *, num_head_tokens, is_vision):
    # pure-JAX reference mirroring the PyTorch forward (eval mode, p=0 dropout)
    B, S, D = net.shape
    if is_vision:
        return net + pos_encoding
    feature_span = S - num_head_tokens
    pos = pos_encoding[:, :feature_span]
    if num_head_tokens <= 0:
        return net + pos
    return net.at[:, :feature_span].add(pos)


if __name__ == "__main__":
    # module config: dim=32, num_tokens=16, num_head_tokens=1, is_vision=False
    dim = 32
    num_tokens = 16
    num_head_tokens = 1
    B, S = 2, 8  # sequence of 8 tokens (1 head token + 7 feature tokens)

    key = jax.random.PRNGKey(0)
    k_pos, k_net = jax.random.split(key)

    # nn.Parameter(zeros) then trunc_normal_(std=0.02) -> deterministic init here
    pos_encoding = 0.02 * jax.random.truncated_normal(
        k_pos, -2.0, 2.0, (1, num_tokens, dim), dtype=jnp.float32
    )
    net = jax.random.normal(k_net, (B, S, dim), dtype=jnp.float32)

    # non-vision path with one head token
    out = positional_encoding_forward(
        net,
        pos_encoding,
        num_head_tokens=num_head_tokens,
        is_vision=False,
        enable=True,
    )
    out = jax.block_until_ready(out)
    ref = _reference(net, pos_encoding, num_head_tokens=num_head_tokens, is_vision=False)
    assert out.shape == net.shape and out.dtype == net.dtype
    assert jnp.allclose(out, ref, atol=1e-6, rtol=1e-6)

    # vision path (no interpolation needed: matching token counts)
    net_v = jax.random.normal(k_net, (B, num_tokens, dim), dtype=jnp.float32)
    out_v = positional_encoding_forward(
        net_v,
        pos_encoding,
        num_head_tokens=0,
        is_vision=True,
        enable=True,
    )
    out_v = jax.block_until_ready(out_v)
    assert jnp.allclose(out_v, net_v + pos_encoding, atol=1e-6, rtol=1e-6)

    # disabled path is an identity
    assert positional_encoding_forward(
        net, None, num_head_tokens=1, is_vision=False, enable=False
    ) is net

    print("KERNEL_OK")
</pallas_src>

<mosaic_0001>
module attributes {stable_mosaic.version = 11 : i64} {
  func.func @_add_kernel(%arg0: i32, %arg1: i32, %arg2: memref<2x256xf32, #tpu.memory_space<vmem>>, %arg3: memref<1x256xf32, #tpu.memory_space<vmem>>, %arg4: memref<2x256xf32, #tpu.memory_space<vmem>>) attributes {dimension_semantics = [#tpu.dimension_semantics<parallel>, #tpu.dimension_semantics<parallel>], iteration_bounds = array<i64: 1, 1>, scalar_prefetch = 0 : i64, scratch_operands = 0 : i64, tpu.core_type = #tpu.core_type<tc>, window_params = [{transform_indices = @transform_0, window_bounds = array<i64: 2, 256>}, {transform_indices = @transform_1, window_bounds = array<i64: 1, 256>}, {transform_indices = @transform_2, window_bounds = array<i64: 2, 256>}]} {
    %c0 = arith.constant 0 : index
    %c0_0 = arith.constant 0 : index
    %0 = vector.load %arg2[%c0, %c0_0] : memref<2x256xf32, #tpu.memory_space<vmem>>, vector<2x256xf32>
    %c0_1 = arith.constant 0 : index
    %c0_2 = arith.constant 0 : index
    %1 = vector.load %arg3[%c0_1, %c0_2] : memref<1x256xf32, #tpu.memory_space<vmem>>, vector<1x256xf32>
    %2 = vector.broadcast %1 : vector<1x256xf32> to vector<2x256xf32>
    %3 = arith.addf %0, %2 : vector<2x256xf32>
    %c0_3 = arith.constant 0 : index
    %c0_4 = arith.constant 0 : index
    %4 = vector.load %arg4[%c0_3, %c0_4] : memref<2x256xf32, #tpu.memory_space<vmem>>, vector<2x256xf32>
    tpu.vector_store %arg4[%c0_3, %c0_4], %3 {strides = array<i32>} : memref<2x256xf32, #tpu.memory_space<vmem>>, vector<2x256xf32>,
    return
  }
  func.func @transform_0(%arg0: i32, %arg1: i32) -> (i32, i32) {
    %c0_i32 = arith.constant 0 : i32
    return %arg0, %arg1 : i32, i32
  }
  func.func @transform_1(%arg0: i32, %arg1: i32) -> (i32, i32) {
    %c0_i32 = arith.constant 0 : i32
    %c0_i32_0 = arith.constant 0 : i32
    return %c0_i32, %arg1 : i32, i32
  }
  func.func @transform_2(%arg0: i32, %arg1: i32) -> (i32, i32) {
    %c0_i32 = arith.constant 0 : i32
    return %arg0, %arg1 : i32, i32
  }
}

</mosaic_0001>

<llo_original>
// kernel: tpu_custom_call.1
$region0: #{tpu_custom_call.1}
  #allocation0 [shape = 'u32[]', space=smem, size = 0x4, offset = 0x4, fixed_abs, tag = 'smem constant byte address 0x4 - core index']
  #allocation1 [shape = 'u32[144,128]{1,0:T(1,128)}', space=vmem, size = 0x12000, scoped, tag = 'internal scratch']
  %s0 = inlined_call_operand.hbm [shape: f32[2,256], index: 0, kind: input, shape index: {}]
  %s1 = inlined_call_operand.vmem [shape: f32[1,256], index: 1, kind: input, shape index: {}]
  %s2 = inlined_call_operand.hbm [shape: f32[2,256], index: 2, kind: output, shape index: {}]
  %s3 = sld [smem:[#allocation0]]
  $region22: #{tpu_custom_call.1} parent=0
    _
  %s5 = ssub.s32 1, %s3
  %s6 = scalar_select 0, %s5, %s3
  $region1: #{tpu_custom_call.1} parent=0
    #allocation2 [shape = 'u8[2048]{0}', space=vmem, size = 0x800, scoped, tag = 'input window, operand 0, single buffered']
    #allocation3 [shape = 's32[1]{0}', space=sflag, size = 0x4, scoped, tag = 'scoped memory for tpu_custom_call.1']
    #allocation4 [shape = 's32[1]{0}', space=sflag, size = 0x4, scoped, tag = 'scoped memory for tpu_custom_call.1']
    #allocation5 [shape = 'u8[2048]{0}', space=vmem, size = 0x800, scoped, tag = 'output window, operand 0, single buffered']
    %7 = vsyncpa [#allocation3], 0
    %8 = vsyncpa [#allocation4], 0
    // Predicated region
    $region2: #{tpu_custom_call.1} parent=1 // pred_check
      _
    $region3: #{tpu_custom_call.1} parent=1 // pred_check_branch
      %10 = sbr.rel (0) target = $region5
    $region4: #{tpu_custom_call.1} parent=1 // pred_region
      %s12 = ssub.s32 64, 64
      %13 = vsyncadd [#allocation3], %s12
      %s15 = sshll.u32 [#allocation2], 4
      %s16 = int_to_ptr.vmem [resolvable:$true] %s15
      %18 = dma.hbm_to_vmem [thread:$0]  %s0, 64, %s16, [#allocation3]
    $region5: #{tpu_custom_call.1} parent=1 // pred_fallthru
      _
    // Predicated region
    $region6: #{tpu_custom_call.1} parent=1 // pred_check
      _
    $region7: #{tpu_custom_call.1} parent=1 // pred_check_branch
      %20 = sbr.rel (0) target = $region9
    $region8: #{tpu_custom_call.1} parent=1 // pred_region
      _
    $region9: #{tpu_custom_call.1} parent=1 // pred_fallthru
      _
    // Predicated region
    $region10: #{tpu_custom_call.1} parent=1 // pred_check
      _
    $region11: #{tpu_custom_call.1} parent=1 // pred_check_branch
      %22 = sbr.rel (0) target = $region13
    $region12: #{tpu_custom_call.1} parent=1 // pred_region
      %23 = dma.done [#allocation3], 64
    $region13: #{tpu_custom_call.1} parent=1 // pred_fallthru
      _
    %v24 = vld [vmem:[#allocation2] sm:$0xf]
    %v25 = vld [vmem:[%s1] sm:$0x3]
    %v27 = vlaneseq
    %v28 = vshrl.u32 %v27, 7
    %v29 = vsub.s32 0, %v28
    %v30 = vrot.slane %v25, %v29
    %v31 = vlaneseq
    %v32 = vshrl.u32 %v31, 7
    %v33 = vsub.s32 1, %v32
    %v34 = vrot.slane %v25, %v33
    %v35 = vcombine.low %v30, %v34
    %v37 = vunpack.c.l.s4 1983009808
    %v38 = vunpack.c.0.s8 %v37
    %v39 = vlaneseq
    %v40 = vshrl.u32 %v39, 7
    %v41 = vsub.s32 %v38, %v40
    %v42 = vrot.slane %v35, %v41
    %v44 = vadd.f32 %v24, %v42
    %45 = vst [vmem:[#allocation5] sm:$0xf] %v44
    // Predicated region
    $region14: #{tpu_custom_call.1} parent=1 // pred_check
      _
    $region15: #{tpu_custom_call.1} parent=1 // pred_check_branch
      %47 = sbr.rel (0) target = $region17
    $region16: #{tpu_custom_call.1} parent=1 // pred_region
      %s49 = ssub.s32 64, 64
      %50 = vsyncadd [#allocation4], %s49
      %s52 = sshll.u32 [#allocation5], 4
      %s53 = int_to_ptr.vmem [resolvable:$true] %s52
      %55 = dma.vmem_to_hbm [thread:$0]  %s53, 64, %s2, [#allocation4]
    $region17: #{tpu_custom_call.1} parent=1 // pred_fallthru
      _
    // Predicated region
    $region18: #{tpu_custom_call.1} parent=1 // pred_check
      _
    $region19: #{tpu_custom_call.1} parent=1 // pred_check_branch
      %57 = sbr.rel (0) target = $region21
    $region20: #{tpu_custom_call.1} parent=1 // pred_region
      %58 = dma.done [#allocation4], 64
    $region21: #{tpu_custom_call.1} parent=1 // pred_fallthru
      _
    %59 = vsyncpa [#allocation3], 1
    %60 = vsyncpa [#allocation4], 1

</llo_original>
